<compile_context>
chip_gen: v7x
topology: tpu7x:2x2x1
jax: 0.10.0
libtpu: 0.0.40
codegen_flags: <defaults>
</compile_context>

<pallas_src>
import jax
import jax.numpy as jnp
from jax.experimental import pallas as pl
from jax.experimental.pallas import tpu as pltpu

HIDDEN_SIZE = 16
INPUT_SIZE = 1
OUTPUT_SIZE = 1
NUM_LAYERS = 2


def rnn_kernel(x_ref,       # (B, T)    batch-first input, feature dim squeezed
               wfused_ref,  # (2H, 2H)  [[Whh0^T, Wih1^T], [0, Whh1^T]]
               vecs_ref,    # (5, 2H)   packed vector rows (see wrapper)
               out_ref):    # (B, 1)
    B, T = x_ref.shape
    H2 = wfused_ref.shape[0]          # 2H

    xall = x_ref[...]                 # (B, T)
    wfused = wfused_ref[...]          # (2H, 2H)
    vecs = vecs_ref[...]              # (5, 2H)

    wih0_2h = vecs[0:1, :]            # [wih0 | 0 ]
    b0_pad = vecs[1:2, :]             # [b0   | 0 ]
    bcat = vecs[2:3, :]               # [b0   | b1]
    wfc_pad = vecs[3:4, :]            # [0    | wfc]
    bfc = vecs[4:5, 0:1]              # (1, 1)

    # ---- hoisted, loop-invariant VPU work (off the serial chain) ----------
    # slab[t] = [xproj[t+1] | b1]   (xproj[s] = x_s * wih0 + b0)
    # slab[T-1]'s first half only feeds an unused garbage h0(T), so [b0|b1]
    # is fine there.  All kept as traced values in vregs (no VMEM scratch).
    slabs = [xall[:, t + 1:t + 2] * wih0_2h + bcat for t in range(T - 1)]
    slabs.append(bcat)

    # c_0 = [h0(0) | h1(-1)] = [tanh(x_0 * wih0 + b0) | tanh(0)=0]
    c = jnp.tanh(xall[:, 0:1] * wih0_2h + b0_pad)            # (B, 2H)

    # ---- T fused steps: one matmul + one tanh per timestep ----------------
    # c_t = [h0(t) | h1(t-1)]  ->  c_{t+1} = [h0(t+1) | h1(t)]
    for t in range(T):
        c = jnp.tanh(
            jnp.dot(c, wfused, preferred_element_type=jnp.float32)
            + slabs[t])

    # ---- final Linear on h1(T-1): VPU multiply + lane reduce ---------------
    # wfc_pad's zero first half masks out the (unused) h0 half of the carry.
    out_ref[...] = jnp.sum(c * wfc_pad, axis=-1, keepdims=True) + bfc


def init_params(key):
    """Deterministic init mirroring PyTorch's U(-1/sqrt(H), 1/sqrt(H))."""
    bound = 1.0 / jnp.sqrt(jnp.float32(HIDDEN_SIZE))
    ks = jax.random.split(key, 10)
    u = lambda k, shape: jax.random.uniform(
        k, shape, jnp.float32, minval=-bound, maxval=bound)
    return {
        # layer 0
        "w_ih_l0": u(ks[0], (HIDDEN_SIZE, INPUT_SIZE)),
        "w_hh_l0": u(ks[1], (HIDDEN_SIZE, HIDDEN_SIZE)),
        "b_ih_l0": u(ks[2], (HIDDEN_SIZE,)),
        "b_hh_l0": u(ks[3], (HIDDEN_SIZE,)),
        # layer 1
        "w_ih_l1": u(ks[4], (HIDDEN_SIZE, HIDDEN_SIZE)),
        "w_hh_l1": u(ks[5], (HIDDEN_SIZE, HIDDEN_SIZE)),
        "b_ih_l1": u(ks[6], (HIDDEN_SIZE,)),
        "b_hh_l1": u(ks[7], (HIDDEN_SIZE,)),
        # fc
        "w_fc": u(ks[8], (OUTPUT_SIZE, HIDDEN_SIZE)),
        "b_fc": u(ks[9], (OUTPUT_SIZE,)),
    }


def rnn_model_forward(x, params):
    """x: (B, T, INPUT_SIZE) batch-first, like the PyTorch module."""
    B, T, I = x.shape
    assert I == INPUT_SIZE
    H = HIDDEN_SIZE
    H2 = 2 * H

    # Squeeze the trailing feature dim (free, layout-compatible reshape).
    x2d = x.reshape(B, T).astype(jnp.float32)                     # (B, T)

    # ---- one-time weight prep (tiny, parameter-only) -----------------------
    # Fused recurrence weight: output cols [:H] give the layer-0 recurrent
    # pre-act for step t+1, cols [H:] give the layer-1 pre-act for step t.
    wfused = jnp.zeros((H2, H2), jnp.float32)
    wfused = wfused.at[:H, :H].set(params["w_hh_l0"].T)           # h0 -> h0'
    wfused = wfused.at[:H, H:].set(params["w_ih_l1"].T)           # h0 -> h1
    wfused = wfused.at[H:, H:].set(params["w_hh_l1"].T)           # h1 -> h1
    # (rows H:, cols :H stay zero: h1 does not feed layer 0)

    wih0 = params["w_ih_l0"].reshape(1, H)                        # (1, H)
    b0 = (params["b_ih_l0"] + params["b_hh_l0"]).reshape(1, H)
    b1 = (params["b_ih_l1"] + params["b_hh_l1"]).reshape(1, H)
    wfc = params["w_fc"].reshape(1, H)
    bfc = params["b_fc"].reshape(1, OUTPUT_SIZE)

    zH = jnp.zeros((1, H), jnp.float32)
    vecs = jnp.concatenate([
        jnp.concatenate([wih0, zH], axis=1),                      # [wih0 | 0 ]
        jnp.concatenate([b0, zH], axis=1),                        # [b0   | 0 ]
        jnp.concatenate([b0, b1], axis=1),                        # [b0   | b1]
        jnp.concatenate([zH, wfc], axis=1),                       # [0    | wfc]
        jnp.concatenate([bfc, jnp.zeros((1, H2 - 1), jnp.float32)], axis=1),
    ], axis=0)                                                    # (5, 2H)

    vmem = pl.BlockSpec(memory_space=pltpu.VMEM)
    out = pl.pallas_call(
        rnn_kernel,
        out_shape=jax.ShapeDtypeStruct((B, OUTPUT_SIZE), jnp.float32),
        in_specs=[vmem, vmem, vmem],
        out_specs=vmem,
        compiler_params=pltpu.CompilerParams(
            dimension_semantics=(),
            vmem_limit_bytes=4 * 1024 * 1024),
    )(x2d, wfused, vecs)
    return out


def rnn_reference(x, params):
    """Pure-JAX reference mirroring torch nn.RNN(tanh, 2 layers) + Linear."""
    B, T, _ = x.shape
    h0 = jnp.zeros((B, HIDDEN_SIZE), jnp.float32)
    h1 = jnp.zeros((B, HIDDEN_SIZE), jnp.float32)
    for t in range(T):
        xt = x[:, t, :]
        h0 = jnp.tanh(xt @ params["w_ih_l0"].T + params["b_ih_l0"]
                      + h0 @ params["w_hh_l0"].T + params["b_hh_l0"])
        h1 = jnp.tanh(h0 @ params["w_ih_l1"].T + params["b_ih_l1"]
                      + h1 @ params["w_hh_l1"].T + params["b_hh_l1"])
    return h1 @ params["w_fc"].T + params["b_fc"]


if __name__ == "__main__":
    key = jax.random.PRNGKey(0)
    pkey, xkey = jax.random.split(key)

    params = init_params(pkey)

    B, T = 2, 8
    x = jax.random.normal(xkey, (B, T, INPUT_SIZE), dtype=jnp.float32)

    out = rnn_model_forward(x, params)
    out = jax.block_until_ready(out)
    assert out.shape == (B, OUTPUT_SIZE)

    ref = jax.block_until_ready(rnn_reference(x, params))
    # Generous tolerance covers MXU f32->bf16-pass precision differences
    # while still catching any structural/fusion error.
    assert bool(jnp.allclose(out, ref, atol=2e-2, rtol=2e-2)), (out, ref)

    print("KERNEL_OK")
</pallas_src>

<mosaic_0001>
module attributes {stable_mosaic.version = 11 : i64} {
  func.func @rnn_kernel(%arg0: memref<2x8xf32, #tpu.memory_space<vmem>>, %arg1: memref<32x32xf32, #tpu.memory_space<vmem>>, %arg2: memref<5x32xf32, #tpu.memory_space<vmem>>, %arg3: memref<2x1xf32, #tpu.memory_space<vmem>>) attributes {dimension_semantics = [], scalar_prefetch = 0 : i64, scratch_operands = 0 : i64, tpu.core_type = #tpu.core_type<tc>} {
    %c0 = arith.constant 0 : index
    %c0_0 = arith.constant 0 : index
    %0 = vector.load %arg0[%c0, %c0_0] : memref<2x8xf32, #tpu.memory_space<vmem>>, vector<2x8xf32>
    %c0_1 = arith.constant 0 : index
    %c0_2 = arith.constant 0 : index
    %1 = vector.load %arg1[%c0_1, %c0_2] : memref<32x32xf32, #tpu.memory_space<vmem>>, vector<32x32xf32>
    %c0_3 = arith.constant 0 : index
    %c0_4 = arith.constant 0 : index
    %2 = vector.load %arg2[%c0_3, %c0_4] : memref<5x32xf32, #tpu.memory_space<vmem>>, vector<5x32xf32>
    %3 = vector.extract_strided_slice %2 {offsets = [0, 0], sizes = [1, 32], strides = [1, 1]} : vector<5x32xf32> to vector<1x32xf32>
    %4 = vector.extract_strided_slice %2 {offsets = [1, 0], sizes = [1, 32], strides = [1, 1]} : vector<5x32xf32> to vector<1x32xf32>
    %5 = vector.extract_strided_slice %2 {offsets = [2, 0], sizes = [1, 32], strides = [1, 1]} : vector<5x32xf32> to vector<1x32xf32>
    %6 = vector.extract_strided_slice %2 {offsets = [3, 0], sizes = [1, 32], strides = [1, 1]} : vector<5x32xf32> to vector<1x32xf32>
    %7 = vector.extract_strided_slice %2 {offsets = [4, 0], sizes = [1, 1], strides = [1, 1]} : vector<5x32xf32> to vector<1x1xf32>
    %8 = vector.extract_strided_slice %0 {offsets = [0, 1], sizes = [2, 1], strides = [1, 1]} : vector<2x8xf32> to vector<2x1xf32>
    %9 = vector.broadcast %8 : vector<2x1xf32> to vector<2x32xf32>
    %10 = vector.broadcast %3 : vector<1x32xf32> to vector<2x32xf32>
    %11 = arith.mulf %9, %10 : vector<2x32xf32>
    %12 = vector.broadcast %5 : vector<1x32xf32> to vector<2x32xf32>
    %13 = arith.addf %11, %12 : vector<2x32xf32>
    %14 = vector.extract_strided_slice %0 {offsets = [0, 2], sizes = [2, 1], strides = [1, 1]} : vector<2x8xf32> to vector<2x1xf32>
    %15 = vector.broadcast %14 : vector<2x1xf32> to vector<2x32xf32>
    %16 = vector.broadcast %3 : vector<1x32xf32> to vector<2x32xf32>
    %17 = arith.mulf %15, %16 : vector<2x32xf32>
    %18 = vector.broadcast %5 : vector<1x32xf32> to vector<2x32xf32>
    %19 = arith.addf %17, %18 : vector<2x32xf32>
    %20 = vector.extract_strided_slice %0 {offsets = [0, 3], sizes = [2, 1], strides = [1, 1]} : vector<2x8xf32> to vector<2x1xf32>
    %21 = vector.broadcast %20 : vector<2x1xf32> to vector<2x32xf32>
    %22 = vector.broadcast %3 : vector<1x32xf32> to vector<2x32xf32>
    %23 = arith.mulf %21, %22 : vector<2x32xf32>
    %24 = vector.broadcast %5 : vector<1x32xf32> to vector<2x32xf32>
    %25 = arith.addf %23, %24 : vector<2x32xf32>
    %26 = vector.extract_strided_slice %0 {offsets = [0, 4], sizes = [2, 1], strides = [1, 1]} : vector<2x8xf32> to vector<2x1xf32>
    %27 = vector.broadcast %26 : vector<2x1xf32> to vector<2x32xf32>
    %28 = vector.broadcast %3 : vector<1x32xf32> to vector<2x32xf32>
    %29 = arith.mulf %27, %28 : vector<2x32xf32>
    %30 = vector.broadcast %5 : vector<1x32xf32> to vector<2x32xf32>
    %31 = arith.addf %29, %30 : vector<2x32xf32>
    %32 = vector.extract_strided_slice %0 {offsets = [0, 5], sizes = [2, 1], strides = [1, 1]} : vector<2x8xf32> to vector<2x1xf32>
    %33 = vector.broadcast %32 : vector<2x1xf32> to vector<2x32xf32>
    %34 = vector.broadcast %3 : vector<1x32xf32> to vector<2x32xf32>
    %35 = arith.mulf %33, %34 : vector<2x32xf32>
    %36 = vector.broadcast %5 : vector<1x32xf32> to vector<2x32xf32>
    %37 = arith.addf %35, %36 : vector<2x32xf32>
    %38 = vector.extract_strided_slice %0 {offsets = [0, 6], sizes = [2, 1], strides = [1, 1]} : vector<2x8xf32> to vector<2x1xf32>
    %39 = vector.broadcast %38 : vector<2x1xf32> to vector<2x32xf32>
    %40 = vector.broadcast %3 : vector<1x32xf32> to vector<2x32xf32>
    %41 = arith.mulf %39, %40 : vector<2x32xf32>
    %42 = vector.broadcast %5 : vector<1x32xf32> to vector<2x32xf32>
    %43 = arith.addf %41, %42 : vector<2x32xf32>
    %44 = vector.extract_strided_slice %0 {offsets = [0, 7], sizes = [2, 1], strides = [1, 1]} : vector<2x8xf32> to vector<2x1xf32>
    %45 = vector.broadcast %44 : vector<2x1xf32> to vector<2x32xf32>
    %46 = vector.broadcast %3 : vector<1x32xf32> to vector<2x32xf32>
    %47 = arith.mulf %45, %46 : vector<2x32xf32>
    %48 = vector.broadcast %5 : vector<1x32xf32> to vector<2x32xf32>
    %49 = arith.addf %47, %48 : vector<2x32xf32>
    %50 = vector.extract_strided_slice %0 {offsets = [0, 0], sizes = [2, 1], strides = [1, 1]} : vector<2x8xf32> to vector<2x1xf32>
    %51 = vector.broadcast %50 : vector<2x1xf32> to vector<2x32xf32>
    %52 = vector.broadcast %3 : vector<1x32xf32> to vector<2x32xf32>
    %53 = arith.mulf %51, %52 : vector<2x32xf32>
    %54 = vector.broadcast %4 : vector<1x32xf32> to vector<2x32xf32>
    %55 = arith.addf %53, %54 : vector<2x32xf32>
    %56 = math.tanh %55 : vector<2x32xf32>
    %cst = arith.constant dense<0.000000e+00> : vector<2x32xf32>
    %57 = tpu.matmul %56, %1, %cst {dimension_numbers = #tpu.dot_dimension_numbers<[1], [0], [0], [1], [0, 0, 1, 1], [], []>} : vector<2x32xf32>, vector<32x32xf32>, vector<2x32xf32> -> vector<2x32xf32>
    %58 = arith.addf %57, %13 : vector<2x32xf32>
    %59 = math.tanh %58 : vector<2x32xf32>
    %cst_5 = arith.constant dense<0.000000e+00> : vector<2x32xf32>
    %60 = tpu.matmul %59, %1, %cst_5 {dimension_numbers = #tpu.dot_dimension_numbers<[1], [0], [0], [1], [0, 0, 1, 1], [], []>} : vector<2x32xf32>, vector<32x32xf32>, vector<2x32xf32> -> vector<2x32xf32>
    %61 = arith.addf %60, %19 : vector<2x32xf32>
    %62 = math.tanh %61 : vector<2x32xf32>
    %cst_6 = arith.constant dense<0.000000e+00> : vector<2x32xf32>
    %63 = tpu.matmul %62, %1, %cst_6 {dimension_numbers = #tpu.dot_dimension_numbers<[1], [0], [0], [1], [0, 0, 1, 1], [], []>} : vector<2x32xf32>, vector<32x32xf32>, vector<2x32xf32> -> vector<2x32xf32>
    %64 = arith.addf %63, %25 : vector<2x32xf32>
    %65 = math.tanh %64 : vector<2x32xf32>
    %cst_7 = arith.constant dense<0.000000e+00> : vector<2x32xf32>
    %66 = tpu.matmul %65, %1, %cst_7 {dimension_numbers = #tpu.dot_dimension_numbers<[1], [0], [0], [1], [0, 0, 1, 1], [], []>} : vector<2x32xf32>, vector<32x32xf32>, vector<2x32xf32> -> vector<2x32xf32>
    %67 = arith.addf %66, %31 : vector<2x32xf32>
    %68 = math.tanh %67 : vector<2x32xf32>
    %cst_8 = arith.constant dense<0.000000e+00> : vector<2x32xf32>
    %69 = tpu.matmul %68, %1, %cst_8 {dimension_numbers = #tpu.dot_dimension_numbers<[1], [0], [0], [1], [0, 0, 1, 1], [], []>} : vector<2x32xf32>, vector<32x32xf32>, vector<2x32xf32> -> vector<2x32xf32>
    %70 = arith.addf %69, %37 : vector<2x32xf32>
    %71 = math.tanh %70 : vector<2x32xf32>
    %cst_9 = arith.constant dense<0.000000e+00> : vector<2x32xf32>
    %72 = tpu.matmul %71, %1, %cst_9 {dimension_numbers = #tpu.dot_dimension_numbers<[1], [0], [0], [1], [0, 0, 1, 1], [], []>} : vector<2x32xf32>, vector<32x32xf32>, vector<2x32xf32> -> vector<2x32xf32>
    %73 = arith.addf %72, %43 : vector<2x32xf32>
    %74 = math.tanh %73 : vector<2x32xf32>
    %cst_10 = arith.constant dense<0.000000e+00> : vector<2x32xf32>
    %75 = tpu.matmul %74, %1, %cst_10 {dimension_numbers = #tpu.dot_dimension_numbers<[1], [0], [0], [1], [0, 0, 1, 1], [], []>} : vector<2x32xf32>, vector<32x32xf32>, vector<2x32xf32> -> vector<2x32xf32>
    %76 = arith.addf %75, %49 : vector<2x32xf32>
    %77 = math.tanh %76 : vector<2x32xf32>
    %cst_11 = arith.constant dense<0.000000e+00> : vector<2x32xf32>
    %78 = tpu.matmul %77, %1, %cst_11 {dimension_numbers = #tpu.dot_dimension_numbers<[1], [0], [0], [1], [0, 0, 1, 1], [], []>} : vector<2x32xf32>, vector<32x32xf32>, vector<2x32xf32> -> vector<2x32xf32>
    %79 = vector.broadcast %5 : vector<1x32xf32> to vector<2x32xf32>
    %80 = arith.addf %78, %79 : vector<2x32xf32>
    %81 = math.tanh %80 : vector<2x32xf32>
    %82 = vector.broadcast %6 : vector<1x32xf32> to vector<2x32xf32>
    %83 = arith.mulf %81, %82 : vector<2x32xf32>
    %cst_12 = arith.constant dense<0.000000e+00> : vector<2xf32>
    %84 = vector.multi_reduction <add>, %83, %cst_12 [1] : vector<2x32xf32> to vector<2xf32>
    %85 = vector.shape_cast %84 : vector<2xf32> to vector<2x1xf32>
    %86 = vector.broadcast %7 : vector<1x1xf32> to vector<2x1xf32>
    %87 = arith.addf %85, %86 : vector<2x1xf32>
    %c0_13 = arith.constant 0 : index
    %c0_14 = arith.constant 0 : index
    %88 = vector.load %arg3[%c0_13, %c0_14] : memref<2x1xf32, #tpu.memory_space<vmem>>, vector<2x1xf32>
    tpu.vector_store %arg3[%c0_13, %c0_14], %87 {strides = array<i32>} : memref<2x1xf32, #tpu.memory_space<vmem>>, vector<2x1xf32>,
    return
  }
}

</mosaic_0001>

<llo_original>
// kernel: tpu_custom_call.1
$region0: #{tpu_custom_call.1}
  #allocation0 [shape = 'u32[]', space=smem, size = 0x4, offset = 0x4, fixed_abs, tag = 'smem constant byte address 0x4 - core index']
  #allocation1 [shape = 'u32[144,128]{1,0:T(1,128)}', space=vmem, size = 0x12000, scoped, tag = 'internal scratch']
  %s0 = inlined_call_operand.hbm [shape: f32[2,8], index: 0, kind: input, shape index: {}]
  %s1 = inlined_call_operand.hbm [shape: f32[32,32], index: 1, kind: input, shape index: {}]
  %s2 = inlined_call_operand.hbm [shape: f32[5,32], index: 2, kind: input, shape index: {}]
  %s3 = inlined_call_operand.vmem [shape: f32[2,1], index: 3, kind: output, shape index: {}]
  %s4 = sld [smem:[#allocation0]]
  $region34: #{tpu_custom_call.1} parent=0
    _
  %s6 = ssub.s32 1, %s4
  %s7 = scalar_select 0, %s6, %s4
  $region1: #{tpu_custom_call.1} parent=0
    #allocation2 [shape = 'u8[1024]{0}', space=vmem, size = 0x400, scoped, tag = 'input window, operand 0, single buffered']
    #allocation3 [shape = 's32[1]{0}', space=sflag, size = 0x4, scoped, tag = 'scoped memory for tpu_custom_call.1']
    #allocation4 [shape = 'u8[16384]{0}', space=vmem, size = 0x4000, scoped, tag = 'input window, operand 1, single buffered']
    #allocation5 [shape = 's32[1]{0}', space=sflag, size = 0x4, scoped, tag = 'scoped memory for tpu_custom_call.1']
    #allocation6 [shape = 'u8[4096]{0}', space=vmem, size = 0x1000, scoped, tag = 'input window, operand 2, single buffered']
    %8 = vsyncpa [#allocation3], 0
    %9 = vsyncpa [#allocation5], 0
    // Predicated region
    $region2: #{tpu_custom_call.1} parent=1 // pred_check
      _
    $region3: #{tpu_custom_call.1} parent=1 // pred_check_branch
      %11 = sbr.rel (0) target = $region5
    $region4: #{tpu_custom_call.1} parent=1 // pred_region
      %s13 = ssub.s32 32, 32
      %14 = vsyncadd [#allocation3], %s13
      %s16 = sshll.u32 [#allocation2], 4
      %s17 = int_to_ptr.vmem [resolvable:$true] %s16
      %19 = dma.hbm_to_vmem [thread:$0]  %s0, 32, %s17, [#allocation3]
    $region5: #{tpu_custom_call.1} parent=1 // pred_fallthru
      _
    // Predicated region
    $region6: #{tpu_custom_call.1} parent=1 // pred_check
      _
    $region7: #{tpu_custom_call.1} parent=1 // pred_check_branch
      %21 = sbr.rel (0) target = $region9
    $region8: #{tpu_custom_call.1} parent=1 // pred_region
      %s23 = ssub.s32 512, 512
      %24 = vsyncadd [#allocation5], %s23
      %s25 = sshll.u32 [#allocation4], 4
      %s26 = int_to_ptr.vmem [resolvable:$true] %s25
      %31 = dma.hbm_to_vmem [thread:$0]  %s1, 512, %s26, [#allocation5], 128, 128, 8
    $region9: #{tpu_custom_call.1} parent=1 // pred_fallthru
      _
    // Predicated region
    $region10: #{tpu_custom_call.1} parent=1 // pred_check
      _
    $region11: #{tpu_custom_call.1} parent=1 // pred_check_branch
      %33 = sbr.rel (0) target = $region13
    $region12: #{tpu_custom_call.1} parent=1 // pred_region
      %s35 = ssub.s32 128, 128
      %36 = vsyncadd [#allocation5], %s35
      %s38 = sshll.u32 [#allocation6], 4
      %s39 = int_to_ptr.vmem [resolvable:$true] %s38
      %41 = dma.hbm_to_vmem [thread:$0]  %s2, 128, %s39, [#allocation5]
    $region13: #{tpu_custom_call.1} parent=1 // pred_fallthru
      _
    // Predicated region
    $region14: #{tpu_custom_call.1} parent=1 // pred_check
      _
    $region15: #{tpu_custom_call.1} parent=1 // pred_check_branch
      %43 = sbr.rel (0) target = $region17
    $region16: #{tpu_custom_call.1} parent=1 // pred_region
      %44 = dma.done [#allocation3], 32
    $region17: #{tpu_custom_call.1} parent=1 // pred_fallthru
      _
    // Predicated region
    $region18: #{tpu_custom_call.1} parent=1 // pred_check
      _
    $region19: #{tpu_custom_call.1} parent=1 // pred_check_branch
      %46 = sbr.rel (0) target = $region21
    $region20: #{tpu_custom_call.1} parent=1 // pred_region
      %47 = dma.done [#allocation5], 512
    $region21: #{tpu_custom_call.1} parent=1 // pred_fallthru
      _
    // Predicated region
    $region22: #{tpu_custom_call.1} parent=1 // pred_check
      _
    $region23: #{tpu_custom_call.1} parent=1 // pred_check_branch
      %49 = sbr.rel (0) target = $region25
    $region24: #{tpu_custom_call.1} parent=1 // pred_region
      %50 = dma.done [#allocation5], 128
    $region25: #{tpu_custom_call.1} parent=1 // pred_fallthru
      _
    %v51 = vld [vmem:[#allocation2] sm:$0x3]
    %v52 = vld [vmem:[#allocation4] sm:$0xff]
    %v53 = vld [vmem:[#allocation4 + $0x8] sm:$0xff]
    %v54 = vld [vmem:[#allocation4 + $0x10] sm:$0xff]
    %v55 = vld [vmem:[#allocation4 + $0x18] sm:$0xff]
    %v56 = vld [vmem:[#allocation6] sm:$0x1f]
    %58 = vset.pattern.permute.xlu0 1
    %59 = vperm.xlu0 %58, %v51
    %v60 = vpop.permute.xlu0 %59
    %v62 = vlaneseq
    %v63 = vshrl.u32 %v62, 7
    %v64 = vsub.s32 0, %v63
    %v65 = vrot.slane %v56, %v64
    %v66 = vmul.f32 %v60, %v65
    %v67 = vlaneseq
    %v68 = vshrl.u32 %v67, 7
    %v69 = vsub.s32 2, %v68
    %v70 = vrot.slane %v56, %v69
    %v71 = vadd.f32 %v66, %v70
    %72 = vset.pattern.permute.xlu0 2
    %73 = vperm.xlu0 %72, %v51
    %v74 = vpop.permute.xlu0 %73
    %v76 = vmul.f32 %v74, %v65
    %v77 = vadd.f32 %v76, %v70
    %78 = vset.pattern.permute.xlu0 3
    %79 = vperm.xlu0 %78, %v51
    %v80 = vpop.permute.xlu0 %79
    %v82 = vmul.f32 %v80, %v65
    %v83 = vadd.f32 %v82, %v70
    %84 = vset.pattern.permute.xlu0 4
    %85 = vperm.xlu0 %84, %v51
    %v86 = vpop.permute.xlu0 %85
    %v88 = vmul.f32 %v86, %v65
    %v89 = vadd.f32 %v88, %v70
    %90 = vset.pattern.permute.xlu0 5
    %91 = vperm.xlu0 %90, %v51
    %v92 = vpop.permute.xlu0 %91
    %v94 = vmul.f32 %v92, %v65
    %v95 = vadd.f32 %v94, %v70
    %96 = vset.pattern.permute.xlu0 6
    %97 = vperm.xlu0 %96, %v51
    %v98 = vpop.permute.xlu0 %97
    %v100 = vmul.f32 %v98, %v65
    %v101 = vadd.f32 %v100, %v70
    %102 = vset.pattern.permute.xlu0 7
    %103 = vperm.xlu0 %102, %v51
    %v104 = vpop.permute.xlu0 %103
    %v106 = vmul.f32 %v104, %v65
    %v107 = vadd.f32 %v106, %v70
    %108 = vset.pattern.permute.xlu0 0
    %109 = vperm.xlu0 %108, %v51
    %v110 = vpop.permute.xlu0 %109
    %v112 = vmul.f32 %v110, %v65
    %v113 = vlaneseq
    %v114 = vshrl.u32 %v113, 7
    %v115 = vsub.s32 1, %v114
    %v116 = vrot.slane %v56, %v115
    %v117 = vadd.f32 %v112, %v116
    %v118 = vtanh.pop %v117
    %vm119 = vcmask 261120
    %v121 = vsel %vm119, %v118, 0
    %123 = vmatprep.subr.mxu0 0.0
    %124 = vmatpush1.msra.mxu0 %v52
    %125 = vmatprep.subr.mxu0 0.0
    %126 = vmatpush1.msra.mxu0 %v53
    %127 = vmatprep.subr.mxu0 0.0
    %128 = vmatpush1.msra.mxu0 %v54
    %129 = vmatprep.subr.mxu0 0.0
    %130 = vmatpush1.msra.mxu0 %v55
    %131 = vmatprep.subr.mxu0 0.0
    %132 = vmatpush1.msra.mxu0 0.0
    %133 = vmatprep.subr.mxu0 0.0
    %134 = vmatpush1.msra.mxu0 0.0
    %135 = vmatprep.subr.mxu0 0.0
    %136 = vmatpush1.msra.mxu0 0.0
    %137 = vmatprep.subr.mxu0 0.0
    %138 = vmatpush1.msra.mxu0 0.0
    %139 = vmatprep.subr.mxu0 0.0
    %140 = vmatpush1.msra.mxu0 0.0
    %141 = vmatprep.subr.mxu0 0.0
    %142 = vmatpush1.msra.mxu0 0.0
    %143 = vmatprep.subr.mxu0 0.0
    %144 = vmatpush1.msra.mxu0 0.0
    %145 = vmatprep.subr.mxu0 0.0
    %146 = vmatpush1.msra.mxu0 0.0
    %147 = vmatprep.subr.mxu0 0.0
    %148 = vmatpush1.msra.mxu0 0.0
    %149 = vmatprep.subr.mxu0 0.0
    %150 = vmatpush1.msra.mxu0 0.0
    %151 = vmatprep.subr.mxu0 0.0
    %152 = vmatpush1.msra.mxu0 0.0
    %153 = vmatprep.subr.mxu0 0.0
    %154 = vmatpush1.msra.mxu0 0.0
    %155 = vmatprep.subr.mxu0 0.0
    %156 = vmatpush1.msra.mxu0 0.0
    %157 = vmatprep.subr.mxu0 0.0
    %158 = vmatpush1.msra.mxu0 0.0
    %159 = vmatprep.subr.mxu0 0.0
    %160 = vmatpush1.msra.mxu0 0.0
    %161 = vmatprep.subr.mxu0 0.0
    %162 = vmatpush1.msra.mxu0 0.0
    %163 = vmatprep.subr.mxu0 0.0
    %164 = vmatpush1.msra.mxu0 0.0
    %165 = vmatprep.subr.mxu0 0.0
    %166 = vmatpush1.msra.mxu0 0.0
    %167 = vmatprep.subr.mxu0 0.0
    %168 = vmatpush1.msra.mxu0 0.0
    %169 = vmatprep.subr.mxu0 0.0
    %170 = vmatpush1.msra.mxu0 0.0
    %171 = vmatprep.subr.mxu0 0.0
    %172 = vmatpush1.msra.mxu0 0.0
    %173 = vmatprep.subr.mxu0 0.0
    %174 = vmatpush1.msra.mxu0 0.0
    %175 = vmatprep.subr.mxu0 0.0
    %176 = vmatpush1.msra.mxu0 0.0
    %177 = vmatprep.subr.mxu0 0.0
    %178 = vmatpush1.msra.mxu0 0.0
    %179 = vmatprep.subr.mxu0 0.0
    %180 = vmatpush1.msra.mxu0 0.0
    %181 = vmatprep.subr.mxu0 0.0
    %182 = vmatpush1.msra.mxu0 0.0
    %183 = vmatprep.subr.mxu0 0.0
    %184 = vmatpush1.msra.mxu0 0.0
    %185 = vmatprep.subr.mxu0 0.0
    %186 = vmatpush1.msra.mxu0 0.0
    %187 = vmatprep.mubr.f32.mxu0 0.0
    %188 = vmatmul.mubr.f32.gmra.mrb[0].mxu0 %v121
    %v189 = vpop.f32.mrb[0].mxu0
    %v190 = vadd.f32 %v71, %v189
    %v191 = vpop.f32.mrb[0].mxu0
    %192 = vdwg.mxu0
    %v193 = vtanh.pop %v190
    %v195 = vsel %vm119, %v193, 0
    %197 = vmatprep.subr.mxu0 0.0
    %198 = vmatpush1.msra.mxu0 %v52
    %199 = vmatprep.subr.mxu0 0.0
    %200 = vmatpush1.msra.mxu0 %v53
    %201 = vmatprep.subr.mxu0 0.0
    %202 = vmatpush1.msra.mxu0 %v54
    %203 = vmatprep.subr.mxu0 0.0
    %204 = vmatpush1.msra.mxu0 %v55
    %205 = vmatprep.subr.mxu0 0.0
    %206 = vmatpush1.msra.mxu0 0.0
    %207 = vmatprep.subr.mxu0 0.0
    %208 = vmatpush1.msra.mxu0 0.0
    %209 = vmatprep.subr.mxu0 0.0
    %210 = vmatpush1.msra.mxu0 0.0
    %211 = vmatprep.subr.mxu0 0.0
    %212 = vmatpush1.msra.mxu0 0.0
    %213 = vmatprep.subr.mxu0 0.0
    %214 = vmatpush1.msra.mxu0 0.0
    %215 = vmatprep.subr.mxu0 0.0
    %216 = vmatpush1.msra.mxu0 0.0
    %217 = vmatprep.subr.mxu0 0.0
    %218 = vmatpush1.msra.mxu0 0.0
    %219 = vmatprep.subr.mxu0 0.0
    %220 = vmatpush1.msra.mxu0 0.0
    %221 = vmatprep.subr.mxu0 0.0
    %222 = vmatpush1.msra.mxu0 0.0
    %223 = vmatprep.subr.mxu0 0.0
    %224 = vmatpush1.msra.mxu0 0.0
    %225 = vmatprep.subr.mxu0 0.0
    %226 = vmatpush1.msra.mxu0 0.0
    %227 = vmatprep.subr.mxu0 0.0
    %228 = vmatpush1.msra.mxu0 0.0
    %229 = vmatprep.subr.mxu0 0.0
    %230 = vmatpush1.msra.mxu0 0.0
    %231 = vmatprep.subr.mxu0 0.0
    %232 = vmatpush1.msra.mxu0 0.0
    %233 = vmatprep.subr.mxu0 0.0
    %234 = vmatpush1.msra.mxu0 0.0
    %235 = vmatprep.subr.mxu0 0.0
    %236 = vmatpush1.msra.mxu0 0.0
    %237 = vmatprep.subr.mxu0 0.0
    %238 = vmatpush1.msra.mxu0 0.0
    %239 = vmatprep.subr.mxu0 0.0
    %240 = vmatpush1.msra.mxu0 0.0
    %241 = vmatprep.subr.mxu0 0.0
    %242 = vmatpush1.msra.mxu0 0.0
    %243 = vmatprep.subr.mxu0 0.0
    %244 = vmatpush1.msra.mxu0 0.0
    %245 = vmatprep.subr.mxu0 0.0
    %246 = vmatpush1.msra.mxu0 0.0
    %247 = vmatprep.subr.mxu0 0.0
    %248 = vmatpush1.msra.mxu0 0.0
    %249 = vmatprep.subr.mxu0 0.0
    %250 = vmatpush1.msra.mxu0 0.0
    %251 = vmatprep.subr.mxu0 0.0
    %252 = vmatpush1.msra.mxu0 0.0
    %253 = vmatprep.subr.mxu0 0.0
    %254 = vmatpush1.msra.mxu0 0.0
    %255 = vmatprep.subr.mxu0 0.0
    %256 = vmatpush1.msra.mxu0 0.0
    %257 = vmatprep.subr.mxu0 0.0
    %258 = vmatpush1.msra.mxu0 0.0
    %259 = vmatprep.subr.mxu0 0.0
    %260 = vmatpush1.msra.mxu0 0.0
    %261 = vmatprep.mubr.f32.mxu0 0.0
    %262 = vmatmul.mubr.f32.gmra.mrb[0].mxu0 %v195
    %v263 = vpop.f32.mrb[0].mxu0
    %v264 = vadd.f32 %v77, %v263
    %v265 = vpop.f32.mrb[0].mxu0
    %266 = vdwg.mxu0
    %v267 = vtanh.pop %v264
    %v269 = vsel %vm119, %v267, 0
    %271 = vmatprep.subr.mxu0 0.0
    %272 = vmatpush1.msra.mxu0 %v52
    %273 = vmatprep.subr.mxu0 0.0
    %274 = vmatpush1.msra.mxu0 %v53
    %275 = vmatprep.subr.mxu0 0.0
    %276 = vmatpush1.msra.mxu0 %v54
    %277 = vmatprep.subr.mxu0 0.0
    %278 = vmatpush1.msra.mxu0 %v55
    %279 = vmatprep.subr.mxu0 0.0
    %280 = vmatpush1.msra.mxu0 0.0
    %281 = vmatprep.subr.mxu0 0.0
    %282 = vmatpush1.msra.mxu0 0.0
    %283 = vmatprep.subr.mxu0 0.0
    %284 = vmatpush1.msra.mxu0 0.0
    %285 = vmatprep.subr.mxu0 0.0
    %286 = vmatpush1.msra.mxu0 0.0
    %287 = vmatprep.subr.mxu0 0.0
    %288 = vmatpush1.msra.mxu0 0.0
    %289 = vmatprep.subr.mxu0 0.0
    %290 = vmatpush1.msra.mxu0 0.0
    %291 = vmatprep.subr.mxu0 0.0
    %292 = vmatpush1.msra.mxu0 0.0
    %293 = vmatprep.subr.mxu0 0.0
    %294 = vmatpush1.msra.mxu0 0.0
    %295 = vmatprep.subr.mxu0 0.0
    %296 = vmatpush1.msra.mxu0 0.0
    %297 = vmatprep.subr.mxu0 0.0
    %298 = vmatpush1.msra.mxu0 0.0
    %299 = vmatprep.subr.mxu0 0.0
    %300 = vmatpush1.msra.mxu0 0.0
    %301 = vmatprep.subr.mxu0 0.0
    %302 = vmatpush1.msra.mxu0 0.0
    %303 = vmatprep.subr.mxu0 0.0
    %304 = vmatpush1.msra.mxu0 0.0
    %305 = vmatprep.subr.mxu0 0.0
    %306 = vmatpush1.msra.mxu0 0.0
    %307 = vmatprep.subr.mxu0 0.0
    %308 = vmatpush1.msra.mxu0 0.0
    %309 = vmatprep.subr.mxu0 0.0
    %310 = vmatpush1.msra.mxu0 0.0
    %311 = vmatprep.subr.mxu0 0.0
    %312 = vmatpush1.msra.mxu0 0.0
    %313 = vmatprep.subr.mxu0 0.0
    %314 = vmatpush1.msra.mxu0 0.0
    %315 = vmatprep.subr.mxu0 0.0
    %316 = vmatpush1.msra.mxu0 0.0
    %317 = vmatprep.subr.mxu0 0.0
    %318 = vmatpush1.msra.mxu0 0.0
    %319 = vmatprep.subr.mxu0 0.0
    %320 = vmatpush1.msra.mxu0 0.0
    %321 = vmatprep.subr.mxu0 0.0
    %322 = vmatpush1.msra.mxu0 0.0
    %323 = vmatprep.subr.mxu0 0.0
    %324 = vmatpush1.msra.mxu0 0.0
    %325 = vmatprep.subr.mxu0 0.0
    %326 = vmatpush1.msra.mxu0 0.0
    %327 = vmatprep.subr.mxu0 0.0
    %328 = vmatpush1.msra.mxu0 0.0
    %329 = vmatprep.subr.mxu0 0.0
    %330 = vmatpush1.msra.mxu0 0.0
    %331 = vmatprep.subr.mxu0 0.0
    %332 = vmatpush1.msra.mxu0 0.0
    %333 = vmatprep.subr.mxu0 0.0
    %334 = vmatpush1.msra.mxu0 0.0
    %335 = vmatprep.mubr.f32.mxu0 0.0
    %336 = vmatmul.mubr.f32.gmra.mrb[0].mxu0 %v269
    %v337 = vpop.f32.mrb[0].mxu0
    %v338 = vadd.f32 %v83, %v337
    %v339 = vpop.f32.mrb[0].mxu0
    %340 = vdwg.mxu0
    %v341 = vtanh.pop %v338
    %v343 = vsel %vm119, %v341, 0
    %345 = vmatprep.subr.mxu0 0.0
    %346 = vmatpush1.msra.mxu0 %v52
    %347 = vmatprep.subr.mxu0 0.0
    %348 = vmatpush1.msra.mxu0 %v53
    %349 = vmatprep.subr.mxu0 0.0
    %350 = vmatpush1.msra.mxu0 %v54
    %351 = vmatprep.subr.mxu0 0.0
    %352 = vmatpush1.msra.mxu0 %v55
    %353 = vmatprep.subr.mxu0 0.0
    %354 = vmatpush1.msra.mxu0 0.0
    %355 = vmatprep.subr.mxu0 0.0
    %356 = vmatpush1.msra.mxu0 0.0
    %357 = vmatprep.subr.mxu0 0.0
    %358 = vmatpush1.msra.mxu0 0.0
    %359 = vmatprep.subr.mxu0 0.0
    %360 = vmatpush1.msra.mxu0 0.0
    %361 = vmatprep.subr.mxu0 0.0
    %362 = vmatpush1.msra.mxu0 0.0
    %363 = vmatprep.subr.mxu0 0.0
    %364 = vmatpush1.msra.mxu0 0.0
    %365 = vmatprep.subr.mxu0 0.0
    %366 = vmatpush1.msra.mxu0 0.0
    %367 = vmatprep.subr.mxu0 0.0
    %368 = vmatpush1.msra.mxu0 0.0
    %369 = vmatprep.subr.mxu0 0.0
    %370 = vmatpush1.msra.mxu0 0.0
    %371 = vmatprep.subr.mxu0 0.0
    %372 = vmatpush1.msra.mxu0 0.0
    %373 = vmatprep.subr.mxu0 0.0
    %374 = vmatpush1.msra.mxu0 0.0
    %375 = vmatprep.subr.mxu0 0.0
    %376 = vmatpush1.msra.mxu0 0.0
    %377 = vmatprep.subr.mxu0 0.0
    %378 = vmatpush1.msra.mxu0 0.0
    %379 = vmatprep.subr.mxu0 0.0
    %380 = vmatpush1.msra.mxu0 0.0
    %381 = vmatprep.subr.mxu0 0.0
    %382 = vmatpush1.msra.mxu0 0.0
    %383 = vmatprep.subr.mxu0 0.0
    %384 = vmatpush1.msra.mxu0 0.0
    %385 = vmatprep.subr.mxu0 0.0
    %386 = vmatpush1.msra.mxu0 0.0
    %387 = vmatprep.subr.mxu0 0.0
    %388 = vmatpush1.msra.mxu0 0.0
    %389 = vmatprep.subr.mxu0 0.0
    %390 = vmatpush1.msra.mxu0 0.0
    %391 = vmatprep.subr.mxu0 0.0
    %392 = vmatpush1.msra.mxu0 0.0
    %393 = vmatprep.subr.mxu0 0.0
    %394 = vmatpush1.msra.mxu0 0.0
    %395 = vmatprep.subr.mxu0 0.0
    %396 = vmatpush1.msra.mxu0 0.0
    %397 = vmatprep.subr.mxu0 0.0
    %398 = vmatpush1.msra.mxu0 0.0
    %399 = vmatprep.subr.mxu0 0.0
    %400 = vmatpush1.msra.mxu0 0.0
    %401 = vmatprep.subr.mxu0 0.0
    %402 = vmatpush1.msra.mxu0 0.0
    %403 = vmatprep.subr.mxu0 0.0
    %404 = vmatpush1.msra.mxu0 0.0
    %405 = vmatprep.subr.mxu0 0.0
    %406 = vmatpush1.msra.mxu0 0.0
    %407 = vmatprep.subr.mxu0 0.0
    %408 = vmatpush1.msra.mxu0 0.0
    %409 = vmatprep.mubr.f32.mxu0 0.0
    %410 = vmatmul.mubr.f32.gmra.mrb[0].mxu0 %v343
    %v411 = vpop.f32.mrb[0].mxu0
    %v412 = vadd.f32 %v89, %v411
    %v413 = vpop.f32.mrb[0].mxu0
    %414 = vdwg.mxu0
    %v415 = vtanh.pop %v412
    %v417 = vsel %vm119, %v415, 0
    %419 = vmatprep.subr.mxu0 0.0
    %420 = vmatpush1.msra.mxu0 %v52
    %421 = vmatprep.subr.mxu0 0.0
    %422 = vmatpush1.msra.mxu0 %v53
    %423 = vmatprep.subr.mxu0 0.0
    %424 = vmatpush1.msra.mxu0 %v54
    %425 = vmatprep.subr.mxu0 0.0
    %426 = vmatpush1.msra.mxu0 %v55
    %427 = vmatprep.subr.mxu0 0.0
    %428 = vmatpush1.msra.mxu0 0.0
    %429 = vmatprep.subr.mxu0 0.0
    %430 = vmatpush1.msra.mxu0 0.0
    %431 = vmatprep.subr.mxu0 0.0
    %432 = vmatpush1.msra.mxu0 0.0
    %433 = vmatprep.subr.mxu0 0.0
    %434 = vmatpush1.msra.mxu0 0.0
    %435 = vmatprep.subr.mxu0 0.0
    %436 = vmatpush1.msra.mxu0 0.0
    %437 = vmatprep.subr.mxu0 0.0
    %438 = vmatpush1.msra.mxu0 0.0
    %439 = vmatprep.subr.mxu0 0.0
    %440 = vmatpush1.msra.mxu0 0.0
    %441 = vmatprep.subr.mxu0 0.0
    %442 = vmatpush1.msra.mxu0 0.0
    %443 = vmatprep.subr.mxu0 0.0
    %444 = vmatpush1.msra.mxu0 0.0
    %445 = vmatprep.subr.mxu0 0.0
    %446 = vmatpush1.msra.mxu0 0.0
    %447 = vmatprep.subr.mxu0 0.0
    %448 = vmatpush1.msra.mxu0 0.0
    %449 = vmatprep.subr.mxu0 0.0
    %450 = vmatpush1.msra.mxu0 0.0
    %451 = vmatprep.subr.mxu0 0.0
    %452 = vmatpush1.msra.mxu0 0.0
    %453 = vmatprep.subr.mxu0 0.0
    %454 = vmatpush1.msra.mxu0 0.0
    %455 = vmatprep.subr.mxu0 0.0
    %456 = vmatpush1.msra.mxu0 0.0
    %457 = vmatprep.subr.mxu0 0.0
    %458 = vmatpush1.msra.mxu0 0.0
    %459 = vmatprep.subr.mxu0 0.0
    %460 = vmatpush1.msra.mxu0 0.0
    %461 = vmatprep.subr.mxu0 0.0
    %462 = vmatpush1.msra.mxu0 0.0
    %463 = vmatprep.subr.mxu0 0.0
    %464 = vmatpush1.msra.mxu0 0.0
    %465 = vmatprep.subr.mxu0 0.0
    %466 = vmatpush1.msra.mxu0 0.0
    %467 = vmatprep.subr.mxu0 0.0
    %468 = vmatpush1.msra.mxu0 0.0
    %469 = vmatprep.subr.mxu0 0.0
    %470 = vmatpush1.msra.mxu0 0.0
    %471 = vmatprep.subr.mxu0 0.0
    %472 = vmatpush1.msra.mxu0 0.0
    %473 = vmatprep.subr.mxu0 0.0
    %474 = vmatpush1.msra.mxu0 0.0
    %475 = vmatprep.subr.mxu0 0.0
    %476 = vmatpush1.msra.mxu0 0.0
    %477 = vmatprep.subr.mxu0 0.0
    %478 = vmatpush1.msra.mxu0 0.0
    %479 = vmatprep.subr.mxu0 0.0
    %480 = vmatpush1.msra.mxu0 0.0
    %481 = vmatprep.subr.mxu0 0.0
    %482 = vmatpush1.msra.mxu0 0.0
    %483 = vmatprep.mubr.f32.mxu0 0.0
    %484 = vmatmul.mubr.f32.gmra.mrb[0].mxu0 %v417
    %v485 = vpop.f32.mrb[0].mxu0
    %v486 = vadd.f32 %v95, %v485
    %v487 = vpop.f32.mrb[0].mxu0
    %488 = vdwg.mxu0
    %v489 = vtanh.pop %v486
    %v491 = vsel %vm119, %v489, 0
    %493 = vmatprep.subr.mxu0 0.0
    %494 = vmatpush1.msra.mxu0 %v52
    %495 = vmatprep.subr.mxu0 0.0
    %496 = vmatpush1.msra.mxu0 %v53
    %497 = vmatprep.subr.mxu0 0.0
    %498 = vmatpush1.msra.mxu0 %v54
    %499 = vmatprep.subr.mxu0 0.0
    %500 = vmatpush1.msra.mxu0 %v55
    %501 = vmatprep.subr.mxu0 0.0
    %502 = vmatpush1.msra.mxu0 0.0
    %503 = vmatprep.subr.mxu0 0.0
    %504 = vmatpush1.msra.mxu0 0.0
    %505 = vmatprep.subr.mxu0 0.0
    %506 = vmatpush1.msra.mxu0 0.0
    %507 = vmatprep.subr.mxu0 0.0
    %508 = vmatpush1.msra.mxu0 0.0
    %509 = vmatprep.subr.mxu0 0.0
    %510 = vmatpush1.msra.mxu0 0.0
    %511 = vmatprep.subr.mxu0 0.0
    %512 = vmatpush1.msra.mxu0 0.0
    %513 = vmatprep.subr.mxu0 0.0
    %514 = vmatpush1.msra.mxu0 0.0
    %515 = vmatprep.subr.mxu0 0.0
    %516 = vmatpush1.msra.mxu0 0.0
    %517 = vmatprep.subr.mxu0 0.0
    %518 = vmatpush1.msra.mxu0 0.0
    %519 = vmatprep.subr.mxu0 0.0
    %520 = vmatpush1.msra.mxu0 0.0
    %521 = vmatprep.subr.mxu0 0.0
    %522 = vmatpush1.msra.mxu0 0.0
    %523 = vmatprep.subr.mxu0 0.0
    %524 = vmatpush1.msra.mxu0 0.0
    %525 = vmatprep.subr.mxu0 0.0
    %526 = vmatpush1.msra.mxu0 0.0
    %527 = vmatprep.subr.mxu0 0.0
    %528 = vmatpush1.msra.mxu0 0.0
    %529 = vmatprep.subr.mxu0 0.0
    %530 = vmatpush1.msra.mxu0 0.0
    %531 = vmatprep.subr.mxu0 0.0
    %532 = vmatpush1.msra.mxu0 0.0
    %533 = vmatprep.subr.mxu0 0.0
    %534 = vmatpush1.msra.mxu0 0.0
    %535 = vmatprep.subr.mxu0 0.0
    %536 = vmatpush1.msra.mxu0 0.0
    %537 = vmatprep.subr.mxu0 0.0
    %538 = vmatpush1.msra.mxu0 0.0
    %539 = vmatprep.subr.mxu0 0.0
    %540 = vmatpush1.msra.mxu0 0.0
    %541 = vmatprep.subr.mxu0 0.0
    %542 = vmatpush1.msra.mxu0 0.0
    %543 = vmatprep.subr.mxu0 0.0
    %544 = vmatpush1.msra.mxu0 0.0
    %545 = vmatprep.subr.mxu0 0.0
    %546 = vmatpush1.msra.mxu0 0.0
    %547 = vmatprep.subr.mxu0 0.0
    %548 = vmatpush1.msra.mxu0 0.0
    %549 = vmatprep.subr.mxu0 0.0
    %550 = vmatpush1.msra.mxu0 0.0
    %551 = vmatprep.subr.mxu0 0.0
    %552 = vmatpush1.msra.mxu0 0.0
    %553 = vmatprep.subr.mxu0 0.0
    %554 = vmatpush1.msra.mxu0 0.0
    %555 = vmatprep.subr.mxu0 0.0
    %556 = vmatpush1.msra.mxu0 0.0
    %557 = vmatprep.mubr.f32.mxu0 0.0
    %558 = vmatmul.mubr.f32.gmra.mrb[0].mxu0 %v491
    %v559 = vpop.f32.mrb[0].mxu0
    %v560 = vadd.f32 %v101, %v559
    %v561 = vpop.f32.mrb[0].mxu0
    %562 = vdwg.mxu0
    %v563 = vtanh.pop %v560
    %v565 = vsel %vm119, %v563, 0
    %567 = vmatprep.subr.mxu0 0.0
    %568 = vmatpush1.msra.mxu0 %v52
    %569 = vmatprep.subr.mxu0 0.0
    %570 = vmatpush1.msra.mxu0 %v53
    %571 = vmatprep.subr.mxu0 0.0
    %572 = vmatpush1.msra.mxu0 %v54
    %573 = vmatprep.subr.mxu0 0.0
    %574 = vmatpush1.msra.mxu0 %v55
    %575 = vmatprep.subr.mxu0 0.0
    %576 = vmatpush1.msra.mxu0 0.0
    %577 = vmatprep.subr.mxu0 0.0
    %578 = vmatpush1.msra.mxu0 0.0
    %579 = vmatprep.subr.mxu0 0.0
    %580 = vmatpush1.msra.mxu0 0.0
    %581 = vmatprep.subr.mxu0 0.0
    %582 = vmatpush1.msra.mxu0 0.0
    %583 = vmatprep.subr.mxu0 0.0
    %584 = vmatpush1.msra.mxu0 0.0
    %585 = vmatprep.subr.mxu0 0.0
    %586 = vmatpush1.msra.mxu0 0.0
    %587 = vmatprep.subr.mxu0 0.0
    %588 = vmatpush1.msra.mxu0 0.0
    %589 = vmatprep.subr.mxu0 0.0
    %590 = vmatpush1.msra.mxu0 0.0
    %591 = vmatprep.subr.mxu0 0.0
    %592 = vmatpush1.msra.mxu0 0.0
    %593 = vmatprep.subr.mxu0 0.0
    %594 = vmatpush1.msra.mxu0 0.0
    %595 = vmatprep.subr.mxu0 0.0
    %596 = vmatpush1.msra.mxu0 0.0
    %597 = vmatprep.subr.mxu0 0.0
    %598 = vmatpush1.msra.mxu0 0.0
    %599 = vmatprep.subr.mxu0 0.0
    %600 = vmatpush1.msra.mxu0 0.0
    %601 = vmatprep.subr.mxu0 0.0
    %602 = vmatpush1.msra.mxu0 0.0
    %603 = vmatprep.subr.mxu0 0.0
    %604 = vmatpush1.msra.mxu0 0.0
    %605 = vmatprep.subr.mxu0 0.0
    %606 = vmatpush1.msra.mxu0 0.0
    %607 = vmatprep.subr.mxu0 0.0
    %608 = vmatpush1.msra.mxu0 0.0
    %609 = vmatprep.subr.mxu0 0.0
    %610 = vmatpush1.msra.mxu0 0.0
    %611 = vmatprep.subr.mxu0 0.0
    %612 = vmatpush1.msra.mxu0 0.0
    %613 = vmatprep.subr.mxu0 0.0
    %614 = vmatpush1.msra.mxu0 0.0
    %615 = vmatprep.subr.mxu0 0.0
    %616 = vmatpush1.msra.mxu0 0.0
    %617 = vmatprep.subr.mxu0 0.0
    %618 = vmatpush1.msra.mxu0 0.0
    %619 = vmatprep.subr.mxu0 0.0
    %620 = vmatpush1.msra.mxu0 0.0
    %621 = vmatprep.subr.mxu0 0.0
    %622 = vmatpush1.msra.mxu0 0.0
    %623 = vmatprep.subr.mxu0 0.0
    %624 = vmatpush1.msra.mxu0 0.0
    %625 = vmatprep.subr.mxu0 0.0
    %626 = vmatpush1.msra.mxu0 0.0
    %627 = vmatprep.subr.mxu0 0.0
    %628 = vmatpush1.msra.mxu0 0.0
    %629 = vmatprep.subr.mxu0 0.0
    %630 = vmatpush1.msra.mxu0 0.0
    %631 = vmatprep.mubr.f32.mxu0 0.0
    %632 = vmatmul.mubr.f32.gmra.mrb[0].mxu0 %v565
    %v633 = vpop.f32.mrb[0].mxu0
    %v634 = vadd.f32 %v107, %v633
    %v635 = vpop.f32.mrb[0].mxu0
    %636 = vdwg.mxu0
    %v637 = vtanh.pop %v634
    %v639 = vsel %vm119, %v637, 0
    %641 = vmatprep.subr.mxu0 0.0
    %642 = vmatpush1.msra.mxu0 %v52
    %643 = vmatprep.subr.mxu0 0.0
    %644 = vmatpush1.msra.mxu0 %v53
    %645 = vmatprep.subr.mxu0 0.0
    %646 = vmatpush1.msra.mxu0 %v54
    %647 = vmatprep.subr.mxu0 0.0
    %648 = vmatpush1.msra.mxu0 %v55
    %649 = vmatprep.subr.mxu0 0.0
    %650 = vmatpush1.msra.mxu0 0.0
    %651 = vmatprep.subr.mxu0 0.0
    %652 = vmatpush1.msra.mxu0 0.0
    %653 = vmatprep.subr.mxu0 0.0
    %654 = vmatpush1.msra.mxu0 0.0
    %655 = vmatprep.subr.mxu0 0.0
    %656 = vmatpush1.msra.mxu0 0.0
    %657 = vmatprep.subr.mxu0 0.0
    %658 = vmatpush1.msra.mxu0 0.0
    %659 = vmatprep.subr.mxu0 0.0
    %660 = vmatpush1.msra.mxu0 0.0
    %661 = vmatprep.subr.mxu0 0.0
    %662 = vmatpush1.msra.mxu0 0.0
    %663 = vmatprep.subr.mxu0 0.0
    %664 = vmatpush1.msra.mxu0 0.0
    %665 = vmatprep.subr.mxu0 0.0
    %666 = vmatpush1.msra.mxu0 0.0
    %667 = vmatprep.subr.mxu0 0.0
    %668 = vmatpush1.msra.mxu0 0.0
    %669 = vmatprep.subr.mxu0 0.0
    %670 = vmatpush1.msra.mxu0 0.0
    %671 = vmatprep.subr.mxu0 0.0
    %672 = vmatpush1.msra.mxu0 0.0
    %673 = vmatprep.subr.mxu0 0.0
    %674 = vmatpush1.msra.mxu0 0.0
    %675 = vmatprep.subr.mxu0 0.0
    %676 = vmatpush1.msra.mxu0 0.0
    %677 = vmatprep.subr.mxu0 0.0
    %678 = vmatpush1.msra.mxu0 0.0
    %679 = vmatprep.subr.mxu0 0.0
    %680 = vmatpush1.msra.mxu0 0.0
    %681 = vmatprep.subr.mxu0 0.0
    %682 = vmatpush1.msra.mxu0 0.0
    %683 = vmatprep.subr.mxu0 0.0
    %684 = vmatpush1.msra.mxu0 0.0
    %685 = vmatprep.subr.mxu0 0.0
    %686 = vmatpush1.msra.mxu0 0.0
    %687 = vmatprep.subr.mxu0 0.0
    %688 = vmatpush1.msra.mxu0 0.0
    %689 = vmatprep.subr.mxu0 0.0
    %690 = vmatpush1.msra.mxu0 0.0
    %691 = vmatprep.subr.mxu0 0.0
    %692 = vmatpush1.msra.mxu0 0.0
    %693 = vmatprep.subr.mxu0 0.0
    %694 = vmatpush1.msra.mxu0 0.0
    %695 = vmatprep.subr.mxu0 0.0
    %696 = vmatpush1.msra.mxu0 0.0
    %697 = vmatprep.subr.mxu0 0.0
    %698 = vmatpush1.msra.mxu0 0.0
    %699 = vmatprep.subr.mxu0 0.0
    %700 = vmatpush1.msra.mxu0 0.0
    %701 = vmatprep.subr.mxu0 0.0
    %702 = vmatpush1.msra.mxu0 0.0
    %703 = vmatprep.subr.mxu0 0.0
    %704 = vmatpush1.msra.mxu0 0.0
    %705 = vmatprep.mubr.f32.mxu0 0.0
    %706 = vmatmul.mubr.f32.gmra.mrb[0].mxu0 %v639
    %v707 = vpop.f32.mrb[0].mxu0
    %v708 = vadd.f32 %v70, %v707
    %v709 = vpop.f32.mrb[0].mxu0
    %710 = vdwg.mxu0
    %v711 = vtanh.pop %v708
    %v712 = vlaneseq
    %v713 = vshrl.u32 %v712, 7
    %v714 = vsub.s32 3, %v713
    %v715 = vrot.slane %v56, %v714
    %v716 = vmul.f32 %v711, %v715
    %vm717 = vcmask 254976
    %v718 = vsel %vm717, %v716, 0.0
    %719 = vadd.xlane.f32.xlu0 %v718
    %v720 = vpop.xlane.xlu0 %719
    %v721 = vlaneseq
    %v722 = vshrl.u32 %v721, 7
    %v723 = vsub.s32 4, %v722
    %v724 = vrot.slane %v56, %v723
    %v725 = vadd.f32 %v720, %v724
    %vm726 = vcmask 1024
    %727 = vst.msk [vmem:[%s3] sm:$0x3] %vm726, %v725
    // Predicated region
    $region26: #{tpu_custom_call.1} parent=1 // pred_check
      _
    $region27: #{tpu_custom_call.1} parent=1 // pred_check_branch
      %729 = sbr.rel (0) target = $region29
    $region28: #{tpu_custom_call.1} parent=1 // pred_region
      _
    $region29: #{tpu_custom_call.1} parent=1 // pred_fallthru
      _
    // Predicated region
    $region30: #{tpu_custom_call.1} parent=1 // pred_check
      _
    $region31: #{tpu_custom_call.1} parent=1 // pred_check_branch
      %731 = sbr.rel (0) target = $region33
    $region32: #{tpu_custom_call.1} parent=1 // pred_region
      _
    $region33: #{tpu_custom_call.1} parent=1 // pred_fallthru
      _
    %732 = vsyncpa [#allocation3], 1
    %733 = vsyncpa [#allocation5], 1

</llo_original>
